<compile_context>
chip_gen: v7x
topology: tpu7x:2x2x1
jax: 0.10.0
libtpu: 0.0.40
codegen_flags: <defaults>
</compile_context>

<pallas_src>
import functools

import jax
import jax.numpy as jnp
from jax import lax
from jax.experimental import pallas as pl
from jax.experimental.pallas import tpu as pltpu


def _round_up(x, m):
    return ((x + m - 1) // m) * m


# -----------------------------------------------------------------------------
# Kernels
# -----------------------------------------------------------------------------

def _kernel_resident(x_ref, w_ref, b_ref, out_ref, *, tn):
    # x_ref  : (TM, Dp)     bf16  relu'd embedding rows for this token tile
    # w_ref  : (V_pad, Dp)  bf16  full fc weight, VMEM-resident (fetched from HBM once)
    # b_ref  : (1, TN)      f32   bias tile
    # out_ref: (TM, TN)     out_dtype
    j = pl.program_id(1)
    off = pl.multiple_of(j * tn, 128)
    w_tile = w_ref[pl.ds(off, tn), :]                       # (TN, Dp) slice of resident W
    acc = lax.dot_general(
        x_ref[...],
        w_tile,
        dimension_numbers=(((1,), (1,)), ((), ())),         # contract over D
        preferred_element_type=jnp.float32,
    )
    out_ref[...] = (acc + b_ref[...]).astype(out_ref.dtype)


def _kernel_stream(x_ref, w_ref, b_ref, out_ref):
    # Streaming fallback for very large vocabularies.
    # x_ref  : (TM, Dp) bf16 ; w_ref: (TN, Dp) bf16 (re-used across the inner token axis)
    # b_ref  : (1, TN)  f32  ; out_ref: (TM, TN)
    acc = lax.dot_general(
        x_ref[...],
        w_ref[...],
        dimension_numbers=(((1,), (1,)), ((), ())),
        preferred_element_type=jnp.float32,
    )
    out_ref[...] = (acc + b_ref[...]).astype(out_ref.dtype)


# -----------------------------------------------------------------------------
# Wrapper
# -----------------------------------------------------------------------------

def skipgram_forward(text, emb_table, fc_weight, fc_bias, *, out_dtype=jnp.bfloat16):
    """text: (B, S) int32; emb_table: (V, D); fc_weight: (V, D); fc_bias: (V,).

    Params are ideally pre-cast to bf16 once at init; f32 params are accepted and
    cast here as a fallback.
    """
    B, S = text.shape
    V, D = emb_table.shape
    N = B * S

    ids = text.reshape(N).astype(jnp.int32)

    emb = emb_table if emb_table.dtype == jnp.bfloat16 else emb_table.astype(jnp.bfloat16)
    w = fc_weight if fc_weight.dtype == jnp.bfloat16 else fc_weight.astype(jnp.bfloat16)

    # Gather + ReLU fused in the wrapper -> lane/sublane-dense (N, D) bf16 slab.
    x = jnp.maximum(jnp.take(emb, ids, axis=0), 0)
    b = fc_bias.reshape(1, V).astype(jnp.float32)

    # --- tile sizes -----------------------------------------------------------
    TM = 512 if N >= 512 else _round_up(N, 16)      # 16: native bf16 sublane packing
    TN = 1024 if V >= 1024 else _round_up(V, 128)

    Dp = _round_up(D, 128)
    N_pad = _round_up(N, TM)
    V_pad = _round_up(V, TN)

    if Dp != D:
        x = jnp.pad(x, ((0, 0), (0, Dp - D)))
        w = jnp.pad(w, ((0, 0), (0, Dp - D)))
    if N_pad != N:
        x = jnp.pad(x, ((0, N_pad - N), (0, 0)))
    if V_pad != V:
        w = jnp.pad(w, ((0, V_pad - V), (0, 0)))
        b = jnp.pad(b, ((0, 0), (0, V_pad - V)))

    out_bytes = jnp.dtype(out_dtype).itemsize
    w_bytes = V_pad * Dp * 2

    # Hold W resident when its (default double-buffered) footprint stays well under
    # the v7x 64 MiB/TC budget; otherwise stream vocab tiles (vocab axis outermost).
    resident = w_bytes <= 10 * 1024 * 1024

    # Real double-buffered per-step VMEM footprint (+ headroom). The (1, TN) f32 bias
    # block pads to 8 sublanes in VMEM.
    step_bytes = 2 * (TM * Dp * 2 + 8 * TN * 4 + TM * TN * out_bytes)
    if resident:
        step_bytes += 2 * w_bytes                  # resident weight (double-buffered)
    else:
        step_bytes += 2 * (TN * Dp * 2)            # streamed weight tile
    vmem_limit = min(64 * 1024 * 1024, step_bytes + 4 * 1024 * 1024)

    if resident:
        grid = (N_pad // TM, V_pad // TN)          # tokens outer, vocab inner
        kernel = functools.partial(_kernel_resident, tn=TN)
        in_specs = [
            pl.BlockSpec((TM, Dp), lambda i, j: (i, 0)),      # activations
            pl.BlockSpec((V_pad, Dp), lambda i, j: (0, 0)),   # full weight, fetched once
            pl.BlockSpec((1, TN), lambda i, j: (0, j)),       # bias tile
        ]
        out_spec = pl.BlockSpec((TM, TN), lambda i, j: (i, j))
        x_streams = 1                                          # x fetched once overall
    else:
        grid = (V_pad // TN, N_pad // TM)          # vocab outer: W tile re-used inner
        kernel = _kernel_stream
        in_specs = [
            pl.BlockSpec((TM, Dp), lambda j, i: (i, 0)),
            pl.BlockSpec((TN, Dp), lambda j, i: (j, 0)),
            pl.BlockSpec((1, TN), lambda j, i: (0, j)),
        ]
        out_spec = pl.BlockSpec((TM, TN), lambda j, i: (i, j))
        x_streams = V_pad // TN                    # x slab re-streamed per vocab tile

    cost = pl.CostEstimate(
        flops=2 * N_pad * Dp * V_pad,
        transcendentals=0,
        bytes_accessed=(
            x_streams * N_pad * Dp * 2             # activation reads (incl. re-stream)
            + V_pad * Dp * 2                       # weight reads (once per tile/call)
            + V_pad * 4                            # bias
            + N_pad * V_pad * out_bytes            # logit writeback
        ),
    )

    out = pl.pallas_call(
        kernel,
        out_shape=jax.ShapeDtypeStruct((N_pad, V_pad), out_dtype),
        grid_spec=pltpu.PrefetchScalarGridSpec(
            num_scalar_prefetch=0,
            grid=grid,
            in_specs=in_specs,
            out_specs=out_spec,
        ),
        compiler_params=pltpu.CompilerParams(
            dimension_semantics=("parallel", "parallel"),
            vmem_limit_bytes=vmem_limit,
        ),
        cost_estimate=cost,
    )(x, w, b)

    return out[:N, :V].reshape(B, S, V)


if __name__ == "__main__":
    # Small synthetic configuration (toy vocab / embed dim chosen TPU-friendly).
    VOCAB_SIZE = 256
    EMBED_DIM = 128
    BATCH = 2
    SEQ = 8

    key = jax.random.PRNGKey(0)
    k_emb, k_w, k_b, k_ids = jax.random.split(key, 4)

    # nn.Embedding default init: N(0, 1)
    emb_f32 = jax.random.normal(k_emb, (VOCAB_SIZE, EMBED_DIM), dtype=jnp.float32)
    # nn.Linear default init: U(-1/sqrt(fan_in), 1/sqrt(fan_in))
    bound = 1.0 / jnp.sqrt(EMBED_DIM)
    fcw_f32 = jax.random.uniform(
        k_w, (VOCAB_SIZE, EMBED_DIM), minval=-bound, maxval=bound, dtype=jnp.float32
    )
    fc_bias = jax.random.uniform(
        k_b, (VOCAB_SIZE,), minval=-bound, maxval=bound, dtype=jnp.float32
    )

    # Pre-cast params to bf16 ONCE ("at init"), per perf review -- no per-call cast pass.
    emb_table = emb_f32.astype(jnp.bfloat16)
    fc_weight = fcw_f32.astype(jnp.bfloat16)

    text = jax.random.randint(k_ids, (BATCH, SEQ), 0, VOCAB_SIZE, dtype=jnp.int32)

    out = skipgram_forward(text, emb_table, fc_weight, fc_bias)
    out = jax.block_until_ready(out)
    assert out.shape == (BATCH, SEQ, VOCAB_SIZE)
    out_f32 = out.astype(jnp.float32)

    # Check 1: exact-recipe reference (bf16 gather+relu, bf16 matmul with f32 accumulate,
    # f32 bias add, bf16 output) -> tight tolerance.
    e_bf16 = jnp.maximum(emb_table[text].astype(jnp.bfloat16), 0)
    ref_acc = lax.dot_general(
        e_bf16.reshape(-1, EMBED_DIM),
        fc_weight,
        dimension_numbers=(((1,), (1,)), ((), ())),
        preferred_element_type=jnp.float32,
    ).reshape(BATCH, SEQ, VOCAB_SIZE) + fc_bias
    ref_bf16 = ref_acc.astype(jnp.bfloat16).astype(jnp.float32)
    assert jnp.allclose(out_f32, ref_bf16, atol=1e-2, rtol=1e-2)

    # Check 2: original f32 PyTorch semantics -> loose tolerance for bf16 rounding.
    ref_f32 = jnp.maximum(emb_f32[text], 0.0) @ fcw_f32.T + fc_bias
    assert jnp.allclose(out_f32, ref_f32, atol=5e-2, rtol=5e-2)

    print("KERNEL_OK")
</pallas_src>

<mosaic_0001>
module attributes {stable_mosaic.version = 11 : i64} {
  func.func @_kernel_resident(%arg0: i32, %arg1: i32, %arg2: memref<16x128xbf16, #tpu.memory_space<vmem>>, %arg3: memref<256x128xbf16, #tpu.memory_space<vmem>>, %arg4: memref<1x256xf32, #tpu.memory_space<vmem>>, %arg5: memref<16x256xbf16, #tpu.memory_space<vmem>>) attributes {dimension_semantics = [#tpu.dimension_semantics<parallel>, #tpu.dimension_semantics<parallel>], iteration_bounds = array<i64: 1, 1>, scalar_prefetch = 0 : i64, scratch_operands = 0 : i64, tpu.core_type = #tpu.core_type<tc>, window_params = [{transform_indices = @transform_0, window_bounds = array<i64: 16, 128>}, {pipeline_mode = #tpu.pipeline_mode<synchronous>, transform_indices = @transform_1, window_bounds = array<i64: 256, 128>}, {transform_indices = @transform_2, window_bounds = array<i64: 1, 256>}, {transform_indices = @transform_3, window_bounds = array<i64: 16, 256>}]} {
    %c256_i32 = arith.constant 256 : i32
    %0 = arith.muli %arg1, %c256_i32 : i32
    %1 = tpu.assume_multiple %0, 128 : i32
    %2 = arith.index_cast %1 : i32 to index
    %c0 = arith.constant 0 : index
    %3 = vector.load %arg3[%2, %c0] : memref<256x128xbf16, #tpu.memory_space<vmem>>, vector<256x128xbf16>
    %c0_0 = arith.constant 0 : index
    %c0_1 = arith.constant 0 : index
    %4 = vector.load %arg2[%c0_0, %c0_1] : memref<16x128xbf16, #tpu.memory_space<vmem>>, vector<16x128xbf16>
    %cst = arith.constant dense<0.000000e+00> : vector<16x256xf32>
    %5 = tpu.matmul %4, %3, %cst {dimension_numbers = #tpu.dot_dimension_numbers<[1], [1], [0], [0], [0, 0, 1, 0], [], []>} : vector<16x128xbf16>, vector<256x128xbf16>, vector<16x256xf32> -> vector<16x256xf32>
    %c0_2 = arith.constant 0 : index
    %c0_3 = arith.constant 0 : index
    %6 = vector.load %arg4[%c0_2, %c0_3] : memref<1x256xf32, #tpu.memory_space<vmem>>, vector<1x256xf32>
    %7 = vector.broadcast %6 : vector<1x256xf32> to vector<16x256xf32>
    %8 = arith.addf %5, %7 : vector<16x256xf32>
    %9 = arith.truncf %8 : vector<16x256xf32> to vector<16x256xbf16>
    %c0_4 = arith.constant 0 : index
    %c0_5 = arith.constant 0 : index
    %10 = vector.load %arg5[%c0_4, %c0_5] : memref<16x256xbf16, #tpu.memory_space<vmem>>, vector<16x256xbf16>
    tpu.vector_store %arg5[%c0_4, %c0_5], %9 {strides = array<i32>} : memref<16x256xbf16, #tpu.memory_space<vmem>>, vector<16x256xbf16>,
    return
  }
  func.func @transform_0(%arg0: i32, %arg1: i32) -> (i32, i32) {
    %c0_i32 = arith.constant 0 : i32
    %c0_i32_0 = arith.constant 0 : i32
    return %arg0, %c0_i32 : i32, i32
  }
  func.func @transform_1(%arg0: i32, %arg1: i32) -> (i32, i32) {
    %c0_i32 = arith.constant 0 : i32
    %c0_i32_0 = arith.constant 0 : i32
    %c0_i32_1 = arith.constant 0 : i32
    return %c0_i32, %c0_i32_0 : i32, i32
  }
  func.func @transform_2(%arg0: i32, %arg1: i32) -> (i32, i32) {
    %c0_i32 = arith.constant 0 : i32
    %c0_i32_0 = arith.constant 0 : i32
    return %c0_i32, %arg1 : i32, i32
  }
  func.func @transform_3(%arg0: i32, %arg1: i32) -> (i32, i32) {
    %c0_i32 = arith.constant 0 : i32
    return %arg0, %arg1 : i32, i32
  }
}

</mosaic_0001>

<llo_original>
// kernel: tpu_custom_call.1
$region0: #{tpu_custom_call.1}
  #allocation0 [shape = 'u32[]', space=smem, size = 0x4, offset = 0x4, fixed_abs, tag = 'smem constant byte address 0x4 - core index']
  #allocation1 [shape = 'u32[144,128]{1,0:T(1,128)}', space=vmem, size = 0x12000, scoped, tag = 'internal scratch']
  %s0 = inlined_call_operand.hbm [shape: bf16[16,128], index: 0, kind: input, shape index: {}]
  %s1 = inlined_call_operand.hbm [shape: bf16[256,128], index: 1, kind: input, shape index: {}]
  %s2 = inlined_call_operand.vmem [shape: f32[1,256], index: 2, kind: input, shape index: {}]
  %s3 = inlined_call_operand.hbm [shape: bf16[16,256], index: 3, kind: output, shape index: {}]
  %s4 = sld [smem:[#allocation0]]
  $region30: #{tpu_custom_call.1} parent=0
    _
  %s6 = ssub.s32 1, %s4
  %s7 = scalar_select 0, %s6, %s4
  $region1: #{tpu_custom_call.1} parent=0
    #allocation2 [shape = 'u8[4096]{0}', space=vmem, size = 0x1000, scoped, tag = 'input window, operand 0, single buffered']
    #allocation3 [shape = 's32[1]{0}', space=sflag, size = 0x4, scoped, tag = 'scoped memory for tpu_custom_call.1']
    #allocation4 [shape = 's32[1]{0}', space=sflag, size = 0x4, scoped, tag = 'scoped memory for tpu_custom_call.1']
    #allocation5 [shape = 'u8[65536]{0}', space=vmem, size = 0x10000, scoped, tag = 'input window, operand 1, single buffered']
    #allocation6 [shape = 's32[1]{0}', space=sflag, size = 0x4, scoped, tag = 'scoped memory for tpu_custom_call.1']
    #allocation7 [shape = 'u8[8192]{0}', space=vmem, size = 0x2000, scoped, tag = 'output window, operand 0, single buffered']
    %8 = vsyncpa [#allocation3], 0
    %9 = vsyncpa [#allocation6], 0
    %10 = vsyncpa [#allocation4], 0
    // Predicated region
    $region2: #{tpu_custom_call.1} parent=1 // pred_check
      _
    $region3: #{tpu_custom_call.1} parent=1 // pred_check_branch
      %12 = sbr.rel (0) target = $region5
    $region4: #{tpu_custom_call.1} parent=1 // pred_region
      %s14 = ssub.s32 128, 128
      %15 = vsyncadd [#allocation3], %s14
      %s16 = sshll.u32 [#allocation2], 4
      %s17 = int_to_ptr.vmem [resolvable:$true] %s16
      %22 = dma.hbm_to_vmem [thread:$0]  %s0, 128, %s17, [#allocation3], 64, 64, 4
    $region5: #{tpu_custom_call.1} parent=1 // pred_fallthru
      _
    // Predicated region
    $region6: #{tpu_custom_call.1} parent=1 // pred_check
      _
    $region7: #{tpu_custom_call.1} parent=1 // pred_check_branch
      %24 = sbr.rel (0) target = $region9
    $region8: #{tpu_custom_call.1} parent=1 // pred_region
      %s26 = ssub.s32 2048, 2048
      %27 = vsyncadd [#allocation6], %s26
      %s28 = sshll.u32 [#allocation5], 4
      %s29 = int_to_ptr.vmem [resolvable:$true] %s28
      %34 = dma.hbm_to_vmem [thread:$0]  %s1, 2048, %s29, [#allocation6], 64, 64, 4
    $region9: #{tpu_custom_call.1} parent=1 // pred_fallthru
      _
    // Predicated region
    $region10: #{tpu_custom_call.1} parent=1 // pred_check
      _
    $region11: #{tpu_custom_call.1} parent=1 // pred_check_branch
      %36 = sbr.rel (0) target = $region13
    $region12: #{tpu_custom_call.1} parent=1 // pred_region
      _
    $region13: #{tpu_custom_call.1} parent=1 // pred_fallthru
      _
    // Predicated region
    $region14: #{tpu_custom_call.1} parent=1 // pred_check
      _
    $region15: #{tpu_custom_call.1} parent=1 // pred_check_branch
      %38 = sbr.rel (0) target = $region17
    $region16: #{tpu_custom_call.1} parent=1 // pred_region
      %39 = dma.done [#allocation3], 128
    $region17: #{tpu_custom_call.1} parent=1 // pred_fallthru
      _
    // Predicated region
    $region18: #{tpu_custom_call.1} parent=1 // pred_check
      _
    $region19: #{tpu_custom_call.1} parent=1 // pred_check_branch
      %41 = sbr.rel (0) target = $region21
    $region20: #{tpu_custom_call.1} parent=1 // pred_region
      %42 = dma.done [#allocation6], 2048
    $region21: #{tpu_custom_call.1} parent=1 // pred_fallthru
      _
    %s44 = smul.u32 0, 256
    %s45 = sshra.s32 %s44, 3
    %s46 = sand.u32 %s44, 7
    %s47 = smul.addr %s45, 4
    %s48 = scalar_lea.vmem [#allocation5], %s47
    %v49 = vld [vmem:[%s48] sm:$0xf]
    %v50 = vld [vmem:[%s48 + $0x4] sm:$0xf]
    %v51 = vld [vmem:[%s48 + $0x8] sm:$0xf]
    %v52 = vld [vmem:[%s48 + $0xc] sm:$0xf]
    %v53 = vld [vmem:[%s48 + $0x10] sm:$0xf]
    %v54 = vld [vmem:[%s48 + $0x14] sm:$0xf]
    %v55 = vld [vmem:[%s48 + $0x18] sm:$0xf]
    %v56 = vld [vmem:[%s48 + $0x1c] sm:$0xf]
    %v57 = vld [vmem:[%s48 + $0x20] sm:$0xf]
    %v58 = vld [vmem:[%s48 + $0x24] sm:$0xf]
    %v59 = vld [vmem:[%s48 + $0x28] sm:$0xf]
    %v60 = vld [vmem:[%s48 + $0x2c] sm:$0xf]
    %v61 = vld [vmem:[%s48 + $0x30] sm:$0xf]
    %v62 = vld [vmem:[%s48 + $0x34] sm:$0xf]
    %v63 = vld [vmem:[%s48 + $0x38] sm:$0xf]
    %v64 = vld [vmem:[%s48 + $0x3c] sm:$0xf]
    %v65 = vld [vmem:[%s48 + $0x40] sm:$0xf]
    %v66 = vld [vmem:[%s48 + $0x44] sm:$0xf]
    %v67 = vld [vmem:[%s48 + $0x48] sm:$0xf]
    %v68 = vld [vmem:[%s48 + $0x4c] sm:$0xf]
    %v69 = vld [vmem:[%s48 + $0x50] sm:$0xf]
    %v70 = vld [vmem:[%s48 + $0x54] sm:$0xf]
    %v71 = vld [vmem:[%s48 + $0x58] sm:$0xf]
    %v72 = vld [vmem:[%s48 + $0x5c] sm:$0xf]
    %v73 = vld [vmem:[%s48 + $0x60] sm:$0xf]
    %v74 = vld [vmem:[%s48 + $0x64] sm:$0xf]
    %v75 = vld [vmem:[%s48 + $0x68] sm:$0xf]
    %v76 = vld [vmem:[%s48 + $0x6c] sm:$0xf]
    %v77 = vld [vmem:[%s48 + $0x70] sm:$0xf]
    %v78 = vld [vmem:[%s48 + $0x74] sm:$0xf]
    %v79 = vld [vmem:[%s48 + $0x78] sm:$0xf]
    %v80 = vld [vmem:[%s48 + $0x7c] sm:$0xf]
    %v81 = vld [vmem:[#allocation2] sm:$0xf]
    %v82 = vld [vmem:[#allocation2 + $0x4] sm:$0xf]
    %v83 = vld [vmem:[%s2] sm:$0x3]
    %v85 = vlaneseq
    %v86 = vshrl.u32 %v85, 7
    %v87 = vsub.s32 0, %v86
    %v88 = vrot.slane %v83, %v87
    %v89 = vlaneseq
    %v90 = vshrl.u32 %v89, 7
    %v91 = vsub.s32 1, %v90
    %v92 = vrot.slane %v83, %v91
    %v97 = vunpack.c.l.b16 %v81
    %v98 = vunpack.c.l.b16 %v82
    %v99 = vpack.c.b16 %v98, %v97
    %v133 = vunpack.c.l.b16 %v49
    %v134 = vunpack.c.l.b16 %v50
    %v135 = vunpack.c.l.b16 %v51
    %v136 = vunpack.c.l.b16 %v52
    %v137 = vunpack.c.l.b16 %v53
    %v138 = vunpack.c.l.b16 %v54
    %v139 = vunpack.c.l.b16 %v55
    %v140 = vunpack.c.l.b16 %v56
    %v141 = vunpack.c.l.b16 %v57
    %v142 = vunpack.c.l.b16 %v58
    %v143 = vunpack.c.l.b16 %v59
    %v144 = vunpack.c.l.b16 %v60
    %v145 = vunpack.c.l.b16 %v61
    %v146 = vunpack.c.l.b16 %v62
    %v147 = vunpack.c.l.b16 %v63
    %v148 = vunpack.c.l.b16 %v64
    %v149 = vunpack.c.l.b16 %v65
    %v150 = vunpack.c.l.b16 %v66
    %v151 = vunpack.c.l.b16 %v67
    %v152 = vunpack.c.l.b16 %v68
    %v153 = vunpack.c.l.b16 %v69
    %v154 = vunpack.c.l.b16 %v70
    %v155 = vunpack.c.l.b16 %v71
    %v156 = vunpack.c.l.b16 %v72
    %v157 = vunpack.c.l.b16 %v73
    %v158 = vunpack.c.l.b16 %v74
    %v159 = vunpack.c.l.b16 %v75
    %v160 = vunpack.c.l.b16 %v76
    %v161 = vunpack.c.l.b16 %v77
    %v162 = vunpack.c.l.b16 %v78
    %v163 = vunpack.c.l.b16 %v79
    %v164 = vunpack.c.l.b16 %v80
    %v165 = vpack.c.b16 %v134, %v133
    %v166 = vpack.c.b16 %v136, %v135
    %v167 = vpack.c.b16 %v138, %v137
    %v168 = vpack.c.b16 %v140, %v139
    %v169 = vpack.c.b16 %v142, %v141
    %v170 = vpack.c.b16 %v144, %v143
    %v171 = vpack.c.b16 %v146, %v145
    %v172 = vpack.c.b16 %v148, %v147
    %v173 = vpack.c.b16 %v150, %v149
    %v174 = vpack.c.b16 %v152, %v151
    %v175 = vpack.c.b16 %v154, %v153
    %v176 = vpack.c.b16 %v156, %v155
    %v177 = vpack.c.b16 %v158, %v157
    %v178 = vpack.c.b16 %v160, %v159
    %v179 = vpack.c.b16 %v162, %v161
    %v180 = vpack.c.b16 %v164, %v163
    %197 = vmatprep.subr.bf16.mxu0 0
    %198 = vmatpush1.bf16.xpose.msra.mxu0 %v165
    %199 = vmatprep.subr.bf16.mxu0 0
    %200 = vmatpush1.bf16.xpose.msra.mxu0 %v166
    %201 = vmatprep.subr.bf16.mxu0 0
    %202 = vmatpush1.bf16.xpose.msra.mxu0 %v167
    %203 = vmatprep.subr.bf16.mxu0 0
    %204 = vmatpush1.bf16.xpose.msra.mxu0 %v168
    %205 = vmatprep.subr.bf16.mxu0 0
    %206 = vmatpush1.bf16.xpose.msra.mxu0 %v169
    %207 = vmatprep.subr.bf16.mxu0 0
    %208 = vmatpush1.bf16.xpose.msra.mxu0 %v170
    %209 = vmatprep.subr.bf16.mxu0 0
    %210 = vmatpush1.bf16.xpose.msra.mxu0 %v171
    %211 = vmatprep.subr.bf16.mxu0 0
    %212 = vmatpush1.bf16.xpose.msra.mxu0 %v172
    %213 = vmatprep.subr.bf16.mxu0 0
    %214 = vmatpush1.bf16.xpose.msra.mxu0 %v173
    %215 = vmatprep.subr.bf16.mxu0 0
    %216 = vmatpush1.bf16.xpose.msra.mxu0 %v174
    %217 = vmatprep.subr.bf16.mxu0 0
    %218 = vmatpush1.bf16.xpose.msra.mxu0 %v175
    %219 = vmatprep.subr.bf16.mxu0 0
    %220 = vmatpush1.bf16.xpose.msra.mxu0 %v176
    %221 = vmatprep.subr.bf16.mxu0 0
    %222 = vmatpush1.bf16.xpose.msra.mxu0 %v177
    %223 = vmatprep.subr.bf16.mxu0 0
    %224 = vmatpush1.bf16.xpose.msra.mxu0 %v178
    %225 = vmatprep.subr.bf16.mxu0 0
    %226 = vmatpush1.bf16.xpose.msra.mxu0 %v179
    %227 = vmatprep.subr.bf16.mxu0 0
    %228 = vmatpush1.bf16.xpose.msra.mxu0 %v180
    %229 = vmatprep.mubr.bf16.mxu0 0
    %230 = vmatmul.mubr.bf16.gmra.mrb[0].mxu0 %v99
    %v231 = vpop.f32.mrb[0].mxu0
    %v232 = vadd.f32 %v88, %v231
    %v233 = vpop.f32.mrb[0].mxu0
    %v234 = vadd.f32 %v92, %v233
    %v235 = vpop.f32.mrb[0].mxu0
    %v236 = vadd.f32 %v88, %v235
    %v237 = vpop.f32.mrb[0].mxu0
    %v238 = vadd.f32 %v92, %v237
    %239 = vdwg.mxu0
    %v240 = vpack.c.bf16 %v236, %v232
    %v241 = vpack.c.bf16 %v238, %v234
    %v244 = vunpack.c.l.b16 %v240
    %v245 = vunpack.c.l.b16 %v241
    %v246 = vunpack.c.h.b16 %v240
    %v247 = vunpack.c.h.b16 %v241
    %v248 = vpack.c.b16 %v245, %v244
    %v249 = vpack.c.b16 %v247, %v246
    %252 = vst [vmem:[#allocation7] sm:$0xff] %v248
    %253 = vst [vmem:[#allocation7 + $0x8] sm:$0xff] %v249
    // Predicated region
    $region22: #{tpu_custom_call.1} parent=1 // pred_check
      _
    $region23: #{tpu_custom_call.1} parent=1 // pred_check_branch
      %255 = sbr.rel (0) target = $region25
    $region24: #{tpu_custom_call.1} parent=1 // pred_region
      %s257 = ssub.s32 256, 256
      %258 = vsyncadd [#allocation4], %s257
      %s259 = sshll.u32 [#allocation7], 4
      %s260 = int_to_ptr.vmem [resolvable:$true] %s259
      %265 = dma.vmem_to_hbm [thread:$0]  %s260, 256, %s3, [#allocation4], 128, 128, 8
    $region25: #{tpu_custom_call.1} parent=1 // pred_fallthru
      _
    // Predicated region
    $region26: #{tpu_custom_call.1} parent=1 // pred_check
      _
    $region27: #{tpu_custom_call.1} parent=1 // pred_check_branch
      %267 = sbr.rel (0) target = $region29
    $region28: #{tpu_custom_call.1} parent=1 // pred_region
      %268 = dma.done [#allocation4], 256
    $region29: #{tpu_custom_call.1} parent=1 // pred_fallthru
      _
    %269 = vsyncpa [#allocation3], 1
    %270 = vsyncpa [#allocation6], 1
    %271 = vsyncpa [#allocation4], 1

</llo_original>
